<compile_context>
chip_gen: v7x
topology: tpu7x:2x2x1
jax: 0.10.0
libtpu: 0.0.40
codegen_flags: <defaults>
</compile_context>

<pallas_src>
import jax
import jax.numpy as jnp
import numpy as np
from jax.experimental import pallas as pl
from jax.experimental.pallas import tpu as pltpu


def _round_up(x, m):
    return ((x + m - 1) // m) * m


# ----------------------------------------------------------------------------
# Pallas kernel: full NeuMF compute for one batch tile of TILE_B rows.
# ----------------------------------------------------------------------------
def neumf_kernel(
    u_ref, v_ref,                                 # packed embeddings [TILE_B, D_mlp+D_mf]
    w0u_ref, w0i_ref, b0_ref,                     # MLP fc0 (split user-half / item-half)
    w1_ref, b1_ref,                               # MLP fc1
    w2_ref, b2_ref,                               # MLP fc2
    wf_mlp_ref, wf_gmf_ref, bf_ref,               # final affine (row vectors [1,H], [1,Dmf], [1,1])
    out_ref,                                      # ratings, lane-dense [1, 1, TILE_B]
):
    d_mlp = w0u_ref.shape[0]
    u = u_ref[...]                                # [TILE_B, D_mlp + D_mf]  (bf16)
    v = v_ref[...]

    # --- MLP tower: input concat [u_mlp; i_mlp] fused by splitting W0.
    #     bf16 operands, f32 accumulation on the MXU.
    h = (
        jnp.dot(u[:, :d_mlp], w0u_ref[...], preferred_element_type=jnp.float32)
        + jnp.dot(v[:, :d_mlp], w0i_ref[...], preferred_element_type=jnp.float32)
        + b0_ref[...]
    )
    h = jnp.maximum(h, 0.0)
    h = jnp.maximum(
        jnp.dot(h, w1_ref[...], preferred_element_type=jnp.float32) + b1_ref[...], 0.0)
    h = jnp.maximum(
        jnp.dot(h, w2_ref[...], preferred_element_type=jnp.float32) + b2_ref[...], 0.0)

    # --- GMF branch: elementwise product in f32 (safe on v5e's non-bf16 VPU).
    gmf = u[:, d_mlp:].astype(jnp.float32) * v[:, d_mlp:].astype(jnp.float32)

    # --- Final affine over concat([h, gmf]) as two MXU row-matmuls
    #     wf[1,F] x act[TILE_B,F]^T -> [1, TILE_B]  (contract the shared F axis),
    #     which makes the logits lane-dense (batch on lanes) so the output store
    #     and HBM writeback are unmasked.  Then sigmoid.
    dn = (((1,), (1,)), ((), ()))                 # contract dim 1 of both operands
    logits = (
        jax.lax.dot_general(wf_mlp_ref[...], h, dn, preferred_element_type=jnp.float32)
        + jax.lax.dot_general(wf_gmf_ref[...], gmf, dn, preferred_element_type=jnp.float32)
        + bf_ref[...]
    )                                             # [1, TILE_B]
    out_ref[...] = jax.nn.sigmoid(logits).reshape(out_ref.shape)


# ----------------------------------------------------------------------------
# Wrapper: index padding + embedding gather (glue) + batch-tiled pallas_call.
# ----------------------------------------------------------------------------
def neumf_forward(params, user_indices, item_indices, *, tile_b=4096):
    user_table = params["user_table"]             # [num_users, D_mlp+D_mf]  bf16
    item_table = params["item_table"]             # [num_items, D_mlp+D_mf]  bf16
    d_tot = user_table.shape[1]

    B = int(user_indices.shape[0])
    tile_b = max(128, _round_up(int(tile_b), 128))

    # Batch tile: multiple of 128 (lane-dense output row), capped by tile_b.
    # If the whole batch would otherwise be one huge tile, split it so v7x's
    # second TensorCore also gets a grid step ("parallel" batch axis).
    tb = min(tile_b, _round_up(B, 128))
    if tile_b // 2 < B <= tile_b and B > 128:
        tb = _round_up(pl.cdiv(B, 2), 128)
    n_tiles = pl.cdiv(B, tb)
    b_pad = n_tiles * tb

    # Pad the cheap int32 index vectors (not the gathered floats) so the gathers
    # produce the padded layout directly -- no extra HBM pass over activations.
    pad = b_pad - B
    uidx = user_indices.astype(jnp.int32)
    iidx = item_indices.astype(jnp.int32)
    if pad:
        uidx = jnp.pad(uidx, (0, pad))
        iidx = jnp.pad(iidx, (0, pad))

    # TODO(synk): fuse these gathers into the kernel (scalar-prefetched indices +
    # per-tile row DMA from tables kept at memory_space=pl.ANY).
    u_act = user_table[uidx]                      # [b_pad, D_mlp+D_mf]
    v_act = item_table[iidx]                      # [b_pad, D_mlp+D_mf]

    weights = (
        params["w0_user"], params["w0_item"], params["b0"],
        params["w1"], params["b1"],
        params["w2"], params["b2"],
        params["wf_mlp"], params["wf_gmf"], params["bf"],
    )

    # Activations: tiled along batch (double-buffered pipeline).
    # Weights/biases: constant index_map -> VMEM-resident across all grid steps.
    act_specs = [pl.BlockSpec((tb, d_tot), lambda i: (i, 0)) for _ in range(2)]
    w_specs = [pl.BlockSpec(w.shape, lambda i: (0, 0)) for w in weights]

    # Scoped-VMEM budget: 2 activation streams x 2 pipeline buffers, lane-padded
    # to 128, plus slack for weights/output.  Clamped <=56 MiB so it stays legal
    # on v7x (64 MiB physical VMEM); v5e/v6e have 128 MiB so this is never tight.
    act_item = jnp.dtype(user_table.dtype).itemsize
    est = 2 * 2 * tb * 128 * act_item + (8 << 20)
    vmem_limit = int(min(56 << 20, max(32 << 20, est)))

    out = pl.pallas_call(
        neumf_kernel,
        out_shape=jax.ShapeDtypeStruct((n_tiles, 1, tb), jnp.float32),
        grid=(n_tiles,),
        in_specs=act_specs + w_specs,
        out_specs=pl.BlockSpec((1, 1, tb), lambda i: (i, 0, 0)),
        compiler_params=pltpu.CompilerParams(
            dimension_semantics=("parallel",),    # megacore-shardable on v7x
            vmem_limit_bytes=vmem_limit,
        ),
    )(u_act, v_act, *weights)

    return out.reshape(-1)[:B].reshape(B, 1)


# ----------------------------------------------------------------------------
# Deterministic parameter construction (synthetic, matching module __init__).
# Concat fusions (embedding packing, W0 / Wf splits) are done HERE, once.
# ----------------------------------------------------------------------------
def make_params(key, num_users, num_items, latent_dim_mf, latent_dim_mlp, layers,
                emb_dtype=jnp.bfloat16):
    assert layers[0] == 2 * latent_dim_mlp, "layers[0] must equal 2*latent_dim_mlp"
    ks = jax.random.split(key, 12)
    n01 = lambda k, shape: (0.01 * jax.random.normal(k, shape)).astype(jnp.float32)

    emb_user_mlp = n01(ks[0], (num_users, latent_dim_mlp))
    emb_item_mlp = n01(ks[1], (num_items, latent_dim_mlp))
    emb_user_mf = n01(ks[2], (num_users, latent_dim_mf))
    emb_item_mf = n01(ks[3], (num_items, latent_dim_mf))

    w0 = n01(ks[4], (layers[0], layers[1]))                    # [2*D_mlp, layers[1]]
    wf = n01(ks[10], (layers[-1] + latent_dim_mf, 1))          # [layers[-1]+D_mf, 1]

    return {
        # Packed per-entity embedding tables [D_mlp | D_mf], stored in bf16:
        # halves the dominant HBM activation traffic and the VMEM tile footprint.
        "user_table": jnp.concatenate([emb_user_mlp, emb_user_mf], axis=1).astype(emb_dtype),
        "item_table": jnp.concatenate([emb_item_mlp, emb_item_mf], axis=1).astype(emb_dtype),
        # MLP fc0 split into user/item halves (fused input concat), stored [in,out]
        # (pre-transposed vs torch) in the activation dtype.
        "w0_user": w0[:latent_dim_mlp].astype(emb_dtype),
        "w0_item": w0[latent_dim_mlp:].astype(emb_dtype),
        "b0": n01(ks[5], (1, layers[1])),
        "w1": n01(ks[6], (layers[1], layers[2])),
        "b1": n01(ks[7], (1, layers[2])),
        "w2": n01(ks[8], (layers[2], layers[3])),
        "b2": n01(ks[9], (1, layers[3])),
        # NeuMF final affine, pre-split, stored as f32 row vectors for the
        # in-kernel row-matmuls producing a lane-dense [1, TILE_B] logit row.
        "wf_mlp": wf[:layers[-1]].T,               # [1, layers[-1]]
        "wf_gmf": wf[layers[-1]:].T,               # [1, D_mf]
        "bf": n01(ks[11], (1, 1)),
    }


# ----------------------------------------------------------------------------
# Pure-JAX reference (literal concat-then-matmul form) for correctness.
# Uses the same (bf16-quantized) stored parameters, upcast to f32.
# ----------------------------------------------------------------------------
def neumf_reference(params, user_indices, item_indices):
    d_mlp = params["w0_user"].shape[0]
    u = params["user_table"][user_indices].astype(jnp.float32)
    v = params["item_table"][item_indices].astype(jnp.float32)
    u_mlp, u_mf = u[:, :d_mlp], u[:, d_mlp:]
    i_mlp, i_mf = v[:, :d_mlp], v[:, d_mlp:]

    w0 = jnp.concatenate([params["w0_user"], params["w0_item"]], axis=0).astype(jnp.float32)
    wf = jnp.concatenate([params["wf_mlp"], params["wf_gmf"]], axis=1).T  # [H+Dmf, 1]

    x = jnp.concatenate([u_mlp, i_mlp], axis=-1)
    x = jax.nn.relu(x @ w0 + params["b0"])
    x = jax.nn.relu(x @ params["w1"] + params["b1"])
    x = jax.nn.relu(x @ params["w2"] + params["b2"])
    gmf = u_mf * i_mf
    logits = jnp.concatenate([x, gmf], axis=-1) @ wf + params["bf"]
    return jax.nn.sigmoid(logits)


if __name__ == "__main__":
    # Small, NeuMF-consistent config:
    #   latent_dim_mlp = 8  -> layers = [16, 32, 16, 8];  latent_dim_mf = 8
    num_users, num_items = 32, 48
    latent_dim_mf, latent_dim_mlp = 8, 8
    layers = [16, 32, 16, 8]

    key = jax.random.PRNGKey(0)
    kp, ku, ki = jax.random.split(key, 3)
    params = make_params(kp, num_users, num_items, latent_dim_mf, latent_dim_mlp, layers)

    # Case 1: tiny batch, single grid step (default tile settings).
    batch = 8
    user_idx = jax.random.randint(ku, (batch,), 0, num_users, dtype=jnp.int32)
    item_idx = jax.random.randint(ki, (batch,), 0, num_items, dtype=jnp.int32)
    rating = jax.block_until_ready(neumf_forward(params, user_idx, item_idx))
    ref = neumf_reference(params, user_idx, item_idx)
    np.testing.assert_allclose(np.asarray(rating), np.asarray(ref), rtol=1e-4, atol=1e-5)

    # Case 2: batch that triggers the megacore split (2 grid steps) + index padding.
    batch2 = 300
    ku2, ki2 = jax.random.split(jax.random.PRNGKey(1))
    user_idx2 = jax.random.randint(ku2, (batch2,), 0, num_users, dtype=jnp.int32)
    item_idx2 = jax.random.randint(ki2, (batch2,), 0, num_items, dtype=jnp.int32)
    rating2 = jax.block_until_ready(neumf_forward(params, user_idx2, item_idx2, tile_b=512))
    ref2 = neumf_reference(params, user_idx2, item_idx2)
    np.testing.assert_allclose(np.asarray(rating2), np.asarray(ref2), rtol=1e-4, atol=1e-5)

    # Case 3: small tile -> 3-step pipelined grid with a padded tail tile.
    rating3 = jax.block_until_ready(neumf_forward(params, user_idx2, item_idx2, tile_b=128))
    np.testing.assert_allclose(np.asarray(rating3), np.asarray(ref2), rtol=1e-4, atol=1e-5)

    print("KERNEL_OK")
</pallas_src>

<mosaic_0001>
module attributes {stable_mosaic.version = 11 : i64} {
  func.func @neumf_kernel(%arg0: i32, %arg1: memref<128x16xbf16, #tpu.memory_space<vmem>>, %arg2: memref<128x16xbf16, #tpu.memory_space<vmem>>, %arg3: memref<8x32xbf16, #tpu.memory_space<vmem>>, %arg4: memref<8x32xbf16, #tpu.memory_space<vmem>>, %arg5: memref<1x32xf32, #tpu.memory_space<vmem>>, %arg6: memref<32x16xf32, #tpu.memory_space<vmem>>, %arg7: memref<1x16xf32, #tpu.memory_space<vmem>>, %arg8: memref<16x8xf32, #tpu.memory_space<vmem>>, %arg9: memref<1x8xf32, #tpu.memory_space<vmem>>, %arg10: memref<1x8xf32, #tpu.memory_space<vmem>>, %arg11: memref<1x8xf32, #tpu.memory_space<vmem>>, %arg12: memref<1x1xf32, #tpu.memory_space<vmem>>, %arg13: memref<1x1x128xf32, #tpu.memory_space<vmem>>) attributes {dimension_semantics = [#tpu.dimension_semantics<parallel>], iteration_bounds = array<i64: 1>, scalar_prefetch = 0 : i64, scratch_operands = 0 : i64, tpu.core_type = #tpu.core_type<tc>, window_params = [{transform_indices = @transform_0, window_bounds = array<i64: 128, 16>}, {transform_indices = @transform_1, window_bounds = array<i64: 128, 16>}, {pipeline_mode = #tpu.pipeline_mode<synchronous>, transform_indices = @transform_2, window_bounds = array<i64: 8, 32>}, {pipeline_mode = #tpu.pipeline_mode<synchronous>, transform_indices = @transform_3, window_bounds = array<i64: 8, 32>}, {pipeline_mode = #tpu.pipeline_mode<synchronous>, transform_indices = @transform_4, window_bounds = array<i64: 1, 32>}, {pipeline_mode = #tpu.pipeline_mode<synchronous>, transform_indices = @transform_5, window_bounds = array<i64: 32, 16>}, {pipeline_mode = #tpu.pipeline_mode<synchronous>, transform_indices = @transform_6, window_bounds = array<i64: 1, 16>}, {pipeline_mode = #tpu.pipeline_mode<synchronous>, transform_indices = @transform_7, window_bounds = array<i64: 16, 8>}, {pipeline_mode = #tpu.pipeline_mode<synchronous>, transform_indices = @transform_8, window_bounds = array<i64: 1, 8>}, {pipeline_mode = #tpu.pipeline_mode<synchronous>, transform_indices = @transform_9, window_bounds = array<i64: 1, 8>}, {pipeline_mode = #tpu.pipeline_mode<synchronous>, transform_indices = @transform_10, window_bounds = array<i64: 1, 8>}, {pipeline_mode = #tpu.pipeline_mode<synchronous>, transform_indices = @transform_11, window_bounds = array<i64: 1, 1>}, {transform_indices = @transform_12, window_bounds = array<i64: 1, 1, 128>}]} {
    %c0 = arith.constant 0 : index
    %c0_0 = arith.constant 0 : index
    %0 = vector.load %arg1[%c0, %c0_0] : memref<128x16xbf16, #tpu.memory_space<vmem>>, vector<128x16xbf16>
    %c0_1 = arith.constant 0 : index
    %c0_2 = arith.constant 0 : index
    %1 = vector.load %arg2[%c0_1, %c0_2] : memref<128x16xbf16, #tpu.memory_space<vmem>>, vector<128x16xbf16>
    %2 = vector.extract_strided_slice %0 {offsets = [0, 0], sizes = [128, 8], strides = [1, 1]} : vector<128x16xbf16> to vector<128x8xbf16>
    %c0_3 = arith.constant 0 : index
    %c0_4 = arith.constant 0 : index
    %3 = vector.load %arg3[%c0_3, %c0_4] : memref<8x32xbf16, #tpu.memory_space<vmem>>, vector<8x32xbf16>
    %cst = arith.constant dense<0.000000e+00> : vector<128x32xf32>
    %4 = tpu.matmul %2, %3, %cst {dimension_numbers = #tpu.dot_dimension_numbers<[1], [0], [0], [1], [0, 0, 1, 1], [], []>} : vector<128x8xbf16>, vector<8x32xbf16>, vector<128x32xf32> -> vector<128x32xf32>
    %5 = vector.extract_strided_slice %1 {offsets = [0, 0], sizes = [128, 8], strides = [1, 1]} : vector<128x16xbf16> to vector<128x8xbf16>
    %c0_5 = arith.constant 0 : index
    %c0_6 = arith.constant 0 : index
    %6 = vector.load %arg4[%c0_5, %c0_6] : memref<8x32xbf16, #tpu.memory_space<vmem>>, vector<8x32xbf16>
    %cst_7 = arith.constant dense<0.000000e+00> : vector<128x32xf32>
    %7 = tpu.matmul %5, %6, %cst_7 {dimension_numbers = #tpu.dot_dimension_numbers<[1], [0], [0], [1], [0, 0, 1, 1], [], []>} : vector<128x8xbf16>, vector<8x32xbf16>, vector<128x32xf32> -> vector<128x32xf32>
    %8 = arith.addf %4, %7 : vector<128x32xf32>
    %c0_8 = arith.constant 0 : index
    %c0_9 = arith.constant 0 : index
    %9 = vector.load %arg5[%c0_8, %c0_9] : memref<1x32xf32, #tpu.memory_space<vmem>>, vector<1x32xf32>
    %10 = vector.broadcast %9 : vector<1x32xf32> to vector<128x32xf32>
    %11 = arith.addf %8, %10 : vector<128x32xf32>
    %cst_10 = arith.constant 0.000000e+00 : f32
    %12 = vector.broadcast %cst_10 : f32 to vector<128x32xf32>
    %13 = arith.maximumf %11, %12 : vector<128x32xf32>
    %c0_11 = arith.constant 0 : index
    %c0_12 = arith.constant 0 : index
    %14 = vector.load %arg6[%c0_11, %c0_12] : memref<32x16xf32, #tpu.memory_space<vmem>>, vector<32x16xf32>
    %cst_13 = arith.constant dense<0.000000e+00> : vector<128x16xf32>
    %15 = tpu.matmul %13, %14, %cst_13 {dimension_numbers = #tpu.dot_dimension_numbers<[1], [0], [0], [1], [0, 0, 1, 1], [], []>} : vector<128x32xf32>, vector<32x16xf32>, vector<128x16xf32> -> vector<128x16xf32>
    %c0_14 = arith.constant 0 : index
    %c0_15 = arith.constant 0 : index
    %16 = vector.load %arg7[%c0_14, %c0_15] : memref<1x16xf32, #tpu.memory_space<vmem>>, vector<1x16xf32>
    %17 = vector.broadcast %16 : vector<1x16xf32> to vector<128x16xf32>
    %18 = arith.addf %15, %17 : vector<128x16xf32>
    %cst_16 = arith.constant 0.000000e+00 : f32
    %19 = vector.broadcast %cst_16 : f32 to vector<128x16xf32>
    %20 = arith.maximumf %18, %19 : vector<128x16xf32>
    %c0_17 = arith.constant 0 : index
    %c0_18 = arith.constant 0 : index
    %21 = vector.load %arg8[%c0_17, %c0_18] : memref<16x8xf32, #tpu.memory_space<vmem>>, vector<16x8xf32>
    %cst_19 = arith.constant dense<0.000000e+00> : vector<128x8xf32>
    %22 = tpu.matmul %20, %21, %cst_19 {dimension_numbers = #tpu.dot_dimension_numbers<[1], [0], [0], [1], [0, 0, 1, 1], [], []>} : vector<128x16xf32>, vector<16x8xf32>, vector<128x8xf32> -> vector<128x8xf32>
    %c0_20 = arith.constant 0 : index
    %c0_21 = arith.constant 0 : index
    %23 = vector.load %arg9[%c0_20, %c0_21] : memref<1x8xf32, #tpu.memory_space<vmem>>, vector<1x8xf32>
    %24 = vector.broadcast %23 : vector<1x8xf32> to vector<128x8xf32>
    %25 = arith.addf %22, %24 : vector<128x8xf32>
    %cst_22 = arith.constant 0.000000e+00 : f32
    %26 = vector.broadcast %cst_22 : f32 to vector<128x8xf32>
    %27 = arith.maximumf %25, %26 : vector<128x8xf32>
    %28 = vector.extract_strided_slice %0 {offsets = [0, 8], sizes = [128, 8], strides = [1, 1]} : vector<128x16xbf16> to vector<128x8xbf16>
    %29 = arith.extf %28 : vector<128x8xbf16> to vector<128x8xf32>
    %30 = vector.extract_strided_slice %1 {offsets = [0, 8], sizes = [128, 8], strides = [1, 1]} : vector<128x16xbf16> to vector<128x8xbf16>
    %31 = arith.extf %30 : vector<128x8xbf16> to vector<128x8xf32>
    %32 = arith.mulf %29, %31 : vector<128x8xf32>
    %c0_23 = arith.constant 0 : index
    %c0_24 = arith.constant 0 : index
    %33 = vector.load %arg10[%c0_23, %c0_24] : memref<1x8xf32, #tpu.memory_space<vmem>>, vector<1x8xf32>
    %cst_25 = arith.constant dense<0.000000e+00> : vector<1x128xf32>
    %34 = tpu.matmul %33, %27, %cst_25 {dimension_numbers = #tpu.dot_dimension_numbers<[1], [1], [0], [0], [0, 0, 1, 0], [], []>} : vector<1x8xf32>, vector<128x8xf32>, vector<1x128xf32> -> vector<1x128xf32>
    %c0_26 = arith.constant 0 : index
    %c0_27 = arith.constant 0 : index
    %35 = vector.load %arg11[%c0_26, %c0_27] : memref<1x8xf32, #tpu.memory_space<vmem>>, vector<1x8xf32>
    %cst_28 = arith.constant dense<0.000000e+00> : vector<1x128xf32>
    %36 = tpu.matmul %35, %32, %cst_28 {dimension_numbers = #tpu.dot_dimension_numbers<[1], [1], [0], [0], [0, 0, 1, 0], [], []>} : vector<1x8xf32>, vector<128x8xf32>, vector<1x128xf32> -> vector<1x128xf32>
    %37 = arith.addf %34, %36 : vector<1x128xf32>
    %c0_29 = arith.constant 0 : index
    %c0_30 = arith.constant 0 : index
    %38 = vector.load %arg12[%c0_29, %c0_30] : memref<1x1xf32, #tpu.memory_space<vmem>>, vector<1x1xf32>
    %39 = vector.broadcast %38 : vector<1x1xf32> to vector<1x128xf32>
    %40 = arith.addf %37, %39 : vector<1x128xf32>
    %41 = arith.negf %40 : vector<1x128xf32>
    %42 = math.exp %41 : vector<1x128xf32>
    %cst_31 = arith.constant 1.000000e+00 : f32
    %43 = vector.broadcast %cst_31 : f32 to vector<1x128xf32>
    %44 = arith.addf %43, %42 : vector<1x128xf32>
    %45 = arith.divf %43, %44 : vector<1x128xf32>
    %46 = vector.shape_cast %45 : vector<1x128xf32> to vector<1x1x128xf32>
    %c0_32 = arith.constant 0 : index
    %c0_33 = arith.constant 0 : index
    %c0_34 = arith.constant 0 : index
    %47 = vector.load %arg13[%c0_32, %c0_33, %c0_34] : memref<1x1x128xf32, #tpu.memory_space<vmem>>, vector<1x1x128xf32>
    tpu.vector_store %arg13[%c0_32, %c0_33, %c0_34], %46 {strides = array<i32>} : memref<1x1x128xf32, #tpu.memory_space<vmem>>, vector<1x1x128xf32>,
    return
  }
  func.func @transform_0(%arg0: i32) -> (i32, i32) {
    %c0_i32 = arith.constant 0 : i32
    %c0_i32_0 = arith.constant 0 : i32
    return %arg0, %c0_i32 : i32, i32
  }
  func.func @transform_1(%arg0: i32) -> (i32, i32) {
    %c0_i32 = arith.constant 0 : i32
    %c0_i32_0 = arith.constant 0 : i32
    return %arg0, %c0_i32 : i32, i32
  }
  func.func @transform_2(%arg0: i32) -> (i32, i32) {
    %c0_i32 = arith.constant 0 : i32
    %c0_i32_0 = arith.constant 0 : i32
    %c0_i32_1 = arith.constant 0 : i32
    return %c0_i32, %c0_i32_0 : i32, i32
  }
  func.func @transform_3(%arg0: i32) -> (i32, i32) {
    %c0_i32 = arith.constant 0 : i32
    %c0_i32_0 = arith.constant 0 : i32
    %c0_i32_1 = arith.constant 0 : i32
    return %c0_i32, %c0_i32_0 : i32, i32
  }
  func.func @transform_4(%arg0: i32) -> (i32, i32) {
    %c0_i32 = arith.constant 0 : i32
    %c0_i32_0 = arith.constant 0 : i32
    %c0_i32_1 = arith.constant 0 : i32
    return %c0_i32, %c0_i32_0 : i32, i32
  }
  func.func @transform_5(%arg0: i32) -> (i32, i32) {
    %c0_i32 = arith.constant 0 : i32
    %c0_i32_0 = arith.constant 0 : i32
    %c0_i32_1 = arith.constant 0 : i32
    return %c0_i32, %c0_i32_0 : i32, i32
  }
  func.func @transform_6(%arg0: i32) -> (i32, i32) {
    %c0_i32 = arith.constant 0 : i32
    %c0_i32_0 = arith.constant 0 : i32
    %c0_i32_1 = arith.constant 0 : i32
    return %c0_i32, %c0_i32_0 : i32, i32
  }
  func.func @transform_7(%arg0: i32) -> (i32, i32) {
    %c0_i32 = arith.constant 0 : i32
    %c0_i32_0 = arith.constant 0 : i32
    %c0_i32_1 = arith.constant 0 : i32
    return %c0_i32, %c0_i32_0 : i32, i32
  }
  func.func @transform_8(%arg0: i32) -> (i32, i32) {
    %c0_i32 = arith.constant 0 : i32
    %c0_i32_0 = arith.constant 0 : i32
    %c0_i32_1 = arith.constant 0 : i32
    return %c0_i32, %c0_i32_0 : i32, i32
  }
  func.func @transform_9(%arg0: i32) -> (i32, i32) {
    %c0_i32 = arith.constant 0 : i32
    %c0_i32_0 = arith.constant 0 : i32
    %c0_i32_1 = arith.constant 0 : i32
    return %c0_i32, %c0_i32_0 : i32, i32
  }
  func.func @transform_10(%arg0: i32) -> (i32, i32) {
    %c0_i32 = arith.constant 0 : i32
    %c0_i32_0 = arith.constant 0 : i32
    %c0_i32_1 = arith.constant 0 : i32
    return %c0_i32, %c0_i32_0 : i32, i32
  }
  func.func @transform_11(%arg0: i32) -> (i32, i32) {
    %c0_i32 = arith.constant 0 : i32
    %c0_i32_0 = arith.constant 0 : i32
    %c0_i32_1 = arith.constant 0 : i32
    return %c0_i32, %c0_i32_0 : i32, i32
  }
  func.func @transform_12(%arg0: i32) -> (i32, i32, i32) {
    %c0_i32 = arith.constant 0 : i32
    %c0_i32_0 = arith.constant 0 : i32
    %c0_i32_1 = arith.constant 0 : i32
    return %arg0, %c0_i32, %c0_i32_0 : i32, i32, i32
  }
}

</mosaic_0001>

<llo_original>
// kernel: tpu_custom_call.1
$region0: #{tpu_custom_call.1}
  #allocation0 [shape = 'u32[]', space=smem, size = 0x4, offset = 0x4, fixed_abs, tag = 'smem constant byte address 0x4 - core index']
  #allocation1 [shape = 'u32[144,128]{1,0:T(1,128)}', space=vmem, size = 0x12000, scoped, tag = 'internal scratch']
  #allocation2 [shape = 'f32[1,1]{1,0:T(1,128)S(1)}', space=vmem, size = 0x200, scoped, tag = 'scoped memory for tpu_custom_call.1']
  %s0 = inlined_call_operand.vmem [shape: bf16[128,16], index: 0, kind: input, shape index: {}]
  %s1 = inlined_call_operand.vmem [shape: bf16[128,16], index: 1, kind: input, shape index: {}]
  %s2 = inlined_call_operand.vmem [shape: bf16[8,32], index: 2, kind: input, shape index: {}]
  %s3 = inlined_call_operand.vmem [shape: bf16[8,32], index: 3, kind: input, shape index: {}]
  %s4 = inlined_call_operand.vmem [shape: f32[1,32], index: 4, kind: input, shape index: {}]
  %s5 = inlined_call_operand.vmem [shape: f32[32,16], index: 5, kind: input, shape index: {}]
  %s6 = inlined_call_operand.vmem [shape: f32[1,16], index: 6, kind: input, shape index: {}]
  %s7 = inlined_call_operand.vmem [shape: f32[16,8], index: 7, kind: input, shape index: {}]
  %s8 = inlined_call_operand.vmem [shape: f32[1,8], index: 8, kind: input, shape index: {}]
  %s9 = inlined_call_operand.vmem [shape: f32[1,8], index: 9, kind: input, shape index: {}]
  %s10 = inlined_call_operand.vmem [shape: f32[1,8], index: 10, kind: input, shape index: {}]
  %s11 = inlined_call_operand.<no memory space> [shape: f32[1,1], index: 11, kind: input, shape index: {}]
  %s12 = inlined_call_operand.hbm [shape: f32[1,1,128], index: 12, kind: output, shape index: {}]
  %s13 = sld [smem:[#allocation0]]
  $region58: #{tpu_custom_call.1} parent=0
    _
  %s15 = ssub.s32 1, %s13
  %s16 = scalar_select 0, %s15, %s13
  %v17 = vstv %s11
  %18 = vst [vmem:[#allocation2] sm:$0x1] %v17
  $region1: #{tpu_custom_call.1} parent=0
    #allocation3 [shape = 'u8[512]{0}', space=vmem, size = 0x400, scoped, tag = 'output window, operand 0, single buffered']
    #allocation4 [shape = 's32[1]{0}', space=sflag, size = 0x4, scoped, tag = 'scoped memory for tpu_custom_call.1']
    %19 = vsyncpa [#allocation4], 0
    // Predicated region
    $region2: #{tpu_custom_call.1} parent=1 // pred_check
      _
    $region3: #{tpu_custom_call.1} parent=1 // pred_check_branch
      %21 = sbr.rel (0) target = $region5
    $region4: #{tpu_custom_call.1} parent=1 // pred_region
      _
    $region5: #{tpu_custom_call.1} parent=1 // pred_fallthru
      _
    // Predicated region
    $region6: #{tpu_custom_call.1} parent=1 // pred_check
      _
    $region7: #{tpu_custom_call.1} parent=1 // pred_check_branch
      %23 = sbr.rel (0) target = $region9
    $region8: #{tpu_custom_call.1} parent=1 // pred_region
      _
    $region9: #{tpu_custom_call.1} parent=1 // pred_fallthru
      _
    // Predicated region
    $region10: #{tpu_custom_call.1} parent=1 // pred_check
      _
    $region11: #{tpu_custom_call.1} parent=1 // pred_check_branch
      %25 = sbr.rel (0) target = $region13
    $region12: #{tpu_custom_call.1} parent=1 // pred_region
      _
    $region13: #{tpu_custom_call.1} parent=1 // pred_fallthru
      _
    // Predicated region
    $region14: #{tpu_custom_call.1} parent=1 // pred_check
      _
    $region15: #{tpu_custom_call.1} parent=1 // pred_check_branch
      %27 = sbr.rel (0) target = $region17
    $region16: #{tpu_custom_call.1} parent=1 // pred_region
      _
    $region17: #{tpu_custom_call.1} parent=1 // pred_fallthru
      _
    // Predicated region
    $region18: #{tpu_custom_call.1} parent=1 // pred_check
      _
    $region19: #{tpu_custom_call.1} parent=1 // pred_check_branch
      %29 = sbr.rel (0) target = $region21
    $region20: #{tpu_custom_call.1} parent=1 // pred_region
      _
    $region21: #{tpu_custom_call.1} parent=1 // pred_fallthru
      _
    // Predicated region
    $region22: #{tpu_custom_call.1} parent=1 // pred_check
      _
    $region23: #{tpu_custom_call.1} parent=1 // pred_check_branch
      %31 = sbr.rel (0) target = $region25
    $region24: #{tpu_custom_call.1} parent=1 // pred_region
      _
    $region25: #{tpu_custom_call.1} parent=1 // pred_fallthru
      _
    // Predicated region
    $region26: #{tpu_custom_call.1} parent=1 // pred_check
      _
    $region27: #{tpu_custom_call.1} parent=1 // pred_check_branch
      %33 = sbr.rel (0) target = $region29
    $region28: #{tpu_custom_call.1} parent=1 // pred_region
      _
    $region29: #{tpu_custom_call.1} parent=1 // pred_fallthru
      _
    // Predicated region
    $region30: #{tpu_custom_call.1} parent=1 // pred_check
      _
    $region31: #{tpu_custom_call.1} parent=1 // pred_check_branch
      %35 = sbr.rel (0) target = $region33
    $region32: #{tpu_custom_call.1} parent=1 // pred_region
      _
    $region33: #{tpu_custom_call.1} parent=1 // pred_fallthru
      _
    // Predicated region
    $region34: #{tpu_custom_call.1} parent=1 // pred_check
      _
    $region35: #{tpu_custom_call.1} parent=1 // pred_check_branch
      %37 = sbr.rel (0) target = $region37
    $region36: #{tpu_custom_call.1} parent=1 // pred_region
      _
    $region37: #{tpu_custom_call.1} parent=1 // pred_fallthru
      _
    // Predicated region
    $region38: #{tpu_custom_call.1} parent=1 // pred_check
      _
    $region39: #{tpu_custom_call.1} parent=1 // pred_check_branch
      %39 = sbr.rel (0) target = $region41
    $region40: #{tpu_custom_call.1} parent=1 // pred_region
      _
    $region41: #{tpu_custom_call.1} parent=1 // pred_fallthru
      _
    // Predicated region
    $region42: #{tpu_custom_call.1} parent=1 // pred_check
      _
    $region43: #{tpu_custom_call.1} parent=1 // pred_check_branch
      %41 = sbr.rel (0) target = $region45
    $region44: #{tpu_custom_call.1} parent=1 // pred_region
      _
    $region45: #{tpu_custom_call.1} parent=1 // pred_fallthru
      _
    // Predicated region
    $region46: #{tpu_custom_call.1} parent=1 // pred_check
      _
    $region47: #{tpu_custom_call.1} parent=1 // pred_check_branch
      %43 = sbr.rel (0) target = $region49
    $region48: #{tpu_custom_call.1} parent=1 // pred_region
      _
    $region49: #{tpu_custom_call.1} parent=1 // pred_fallthru
      _
    %v45 = vld [vmem:[%s0] sm:$0xf]
    %v46 = vld [vmem:[%s0 + $0x4] sm:$0xf]
    %v47 = vld [vmem:[%s0 + $0x8] sm:$0xf]
    %v48 = vld [vmem:[%s0 + $0xc] sm:$0xf]
    %v49 = vld [vmem:[%s0 + $0x10] sm:$0xf]
    %v50 = vld [vmem:[%s0 + $0x14] sm:$0xf]
    %v51 = vld [vmem:[%s0 + $0x18] sm:$0xf]
    %v52 = vld [vmem:[%s0 + $0x1c] sm:$0xf]
    %v53 = vld [vmem:[%s0 + $0x20] sm:$0xf]
    %v54 = vld [vmem:[%s0 + $0x24] sm:$0xf]
    %v55 = vld [vmem:[%s0 + $0x28] sm:$0xf]
    %v56 = vld [vmem:[%s0 + $0x2c] sm:$0xf]
    %v57 = vld [vmem:[%s0 + $0x30] sm:$0xf]
    %v58 = vld [vmem:[%s0 + $0x34] sm:$0xf]
    %v59 = vld [vmem:[%s0 + $0x38] sm:$0xf]
    %v60 = vld [vmem:[%s0 + $0x3c] sm:$0xf]
    %v61 = vld [vmem:[%s1] sm:$0xf]
    %v62 = vld [vmem:[%s1 + $0x4] sm:$0xf]
    %v63 = vld [vmem:[%s1 + $0x8] sm:$0xf]
    %v64 = vld [vmem:[%s1 + $0xc] sm:$0xf]
    %v65 = vld [vmem:[%s1 + $0x10] sm:$0xf]
    %v66 = vld [vmem:[%s1 + $0x14] sm:$0xf]
    %v67 = vld [vmem:[%s1 + $0x18] sm:$0xf]
    %v68 = vld [vmem:[%s1 + $0x1c] sm:$0xf]
    %v69 = vld [vmem:[%s1 + $0x20] sm:$0xf]
    %v70 = vld [vmem:[%s1 + $0x24] sm:$0xf]
    %v71 = vld [vmem:[%s1 + $0x28] sm:$0xf]
    %v72 = vld [vmem:[%s1 + $0x2c] sm:$0xf]
    %v73 = vld [vmem:[%s1 + $0x30] sm:$0xf]
    %v74 = vld [vmem:[%s1 + $0x34] sm:$0xf]
    %v75 = vld [vmem:[%s1 + $0x38] sm:$0xf]
    %v76 = vld [vmem:[%s1 + $0x3c] sm:$0xf]
    %v77 = vld [vmem:[%s2] sm:$0xf]
    %v78 = vld [vmem:[%s3] sm:$0xf]
    %v95 = vunpack.c.l.b16 %v61
    %v96 = vunpack.c.l.b16 %v62
    %v97 = vunpack.c.l.b16 %v63
    %v98 = vunpack.c.l.b16 %v64
    %v99 = vunpack.c.l.b16 %v65
    %v100 = vunpack.c.l.b16 %v66
    %v101 = vunpack.c.l.b16 %v67
    %v102 = vunpack.c.l.b16 %v68
    %v103 = vunpack.c.l.b16 %v69
    %v104 = vunpack.c.l.b16 %v70
    %v105 = vunpack.c.l.b16 %v71
    %v106 = vunpack.c.l.b16 %v72
    %v107 = vunpack.c.l.b16 %v73
    %v108 = vunpack.c.l.b16 %v74
    %v109 = vunpack.c.l.b16 %v75
    %v110 = vunpack.c.l.b16 %v76
    %v111 = vpack.c.b16 %v96, %v95
    %v112 = vpack.c.b16 %v98, %v97
    %v113 = vpack.c.b16 %v100, %v99
    %v114 = vpack.c.b16 %v102, %v101
    %v115 = vpack.c.b16 %v104, %v103
    %v116 = vpack.c.b16 %v106, %v105
    %v117 = vpack.c.b16 %v108, %v107
    %v118 = vpack.c.b16 %v110, %v109
    %vm119 = vcmask 64512
    %v121 = vsel %vm119, %v111, 0
    %v124 = vsel %vm119, %v112, 0
    %v127 = vsel %vm119, %v113, 0
    %v130 = vsel %vm119, %v114, 0
    %v133 = vsel %vm119, %v115, 0
    %v136 = vsel %vm119, %v116, 0
    %v139 = vsel %vm119, %v117, 0
    %v142 = vsel %vm119, %v118, 0
    %vm144 = vcmask 1043456
    %v146 = vsel %vm144, %v78, 0
    %148 = vmatprep.subr.bf16.mxu0 0
    %149 = vmatpush1.bf16.msra.mxu0 %v146
    %150 = vmatprep.subr.bf16.mxu0 0
    %151 = vmatpush1.bf16.msra.mxu0 0
    %152 = vmatprep.subr.bf16.mxu0 0
    %153 = vmatpush1.bf16.msra.mxu0 0
    %154 = vmatprep.subr.bf16.mxu0 0
    %155 = vmatpush1.bf16.msra.mxu0 0
    %156 = vmatprep.subr.bf16.mxu0 0
    %157 = vmatpush1.bf16.msra.mxu0 0
    %158 = vmatprep.subr.bf16.mxu0 0
    %159 = vmatpush1.bf16.msra.mxu0 0
    %160 = vmatprep.subr.bf16.mxu0 0
    %161 = vmatpush1.bf16.msra.mxu0 0
    %162 = vmatprep.subr.bf16.mxu0 0
    %163 = vmatpush1.bf16.msra.mxu0 0
    %164 = vmatprep.subr.bf16.mxu0 0
    %165 = vmatpush1.bf16.msra.mxu0 0
    %166 = vmatprep.subr.bf16.mxu0 0
    %167 = vmatpush1.bf16.msra.mxu0 0
    %168 = vmatprep.subr.bf16.mxu0 0
    %169 = vmatpush1.bf16.msra.mxu0 0
    %170 = vmatprep.subr.bf16.mxu0 0
    %171 = vmatpush1.bf16.msra.mxu0 0
    %172 = vmatprep.subr.bf16.mxu0 0
    %173 = vmatpush1.bf16.msra.mxu0 0
    %174 = vmatprep.subr.bf16.mxu0 0
    %175 = vmatpush1.bf16.msra.mxu0 0
    %176 = vmatprep.subr.bf16.mxu0 0
    %177 = vmatpush1.bf16.msra.mxu0 0
    %178 = vmatprep.subr.bf16.mxu0 0
    %179 = vmatpush1.bf16.msra.mxu0 0
    %180 = vmatprep.mubr.bf16.mxu0 0
    %181 = vmatmul.mubr.bf16.gmra.mrb[0].mxu0 %v121
    %v182 = vpop.f32.mrb[0].mxu0
    %v183 = vadd.f32 0.0, %v182
    %v184 = vpop.f32.mrb[0].mxu0
    %v185 = vpop.f32.mrb[0].mxu0
    %v186 = vadd.f32 0.0, %v185
    %v187 = vpop.f32.mrb[0].mxu0
    %188 = vmatprep.mubr.bf16.mxu0 0
    %189 = vmatmul.mubr.bf16.gmra.mrb[0].mxu0 %v124
    %v190 = vpop.f32.mrb[0].mxu0
    %v191 = vadd.f32 0.0, %v190
    %v192 = vpop.f32.mrb[0].mxu0
    %v193 = vpop.f32.mrb[0].mxu0
    %v194 = vadd.f32 0.0, %v193
    %v195 = vpop.f32.mrb[0].mxu0
    %196 = vmatprep.mubr.bf16.mxu0 0
    %197 = vmatmul.mubr.bf16.gmra.mrb[0].mxu0 %v127
    %v198 = vpop.f32.mrb[0].mxu0
    %v199 = vadd.f32 0.0, %v198
    %v200 = vpop.f32.mrb[0].mxu0
    %v201 = vpop.f32.mrb[0].mxu0
    %v202 = vadd.f32 0.0, %v201
    %v203 = vpop.f32.mrb[0].mxu0
    %204 = vmatprep.mubr.bf16.mxu0 0
    %205 = vmatmul.mubr.bf16.gmra.mrb[0].mxu0 %v130
    %v206 = vpop.f32.mrb[0].mxu0
    %v207 = vadd.f32 0.0, %v206
    %v208 = vpop.f32.mrb[0].mxu0
    %v209 = vpop.f32.mrb[0].mxu0
    %v210 = vadd.f32 0.0, %v209
    %v211 = vpop.f32.mrb[0].mxu0
    %212 = vmatprep.mubr.bf16.mxu0 0
    %213 = vmatmul.mubr.bf16.gmra.mrb[0].mxu0 %v133
    %v214 = vpop.f32.mrb[0].mxu0
    %v215 = vadd.f32 0.0, %v214
    %v216 = vpop.f32.mrb[0].mxu0
    %v217 = vpop.f32.mrb[0].mxu0
    %v218 = vadd.f32 0.0, %v217
    %v219 = vpop.f32.mrb[0].mxu0
    %220 = vmatprep.mubr.bf16.mxu0 0
    %221 = vmatmul.mubr.bf16.gmra.mrb[0].mxu0 %v136
    %v222 = vpop.f32.mrb[0].mxu0
    %v223 = vadd.f32 0.0, %v222
    %v224 = vpop.f32.mrb[0].mxu0
    %v225 = vpop.f32.mrb[0].mxu0
    %v226 = vadd.f32 0.0, %v225
    %v227 = vpop.f32.mrb[0].mxu0
    %228 = vmatprep.mubr.bf16.mxu0 0
    %229 = vmatmul.mubr.bf16.gmra.mrb[0].mxu0 %v139
    %v230 = vpop.f32.mrb[0].mxu0
    %v231 = vadd.f32 0.0, %v230
    %v232 = vpop.f32.mrb[0].mxu0
    %v233 = vpop.f32.mrb[0].mxu0
    %v234 = vadd.f32 0.0, %v233
    %v235 = vpop.f32.mrb[0].mxu0
    %236 = vmatprep.mubr.bf16.mxu0 0
    %237 = vmatmul.mubr.bf16.gmra.mrb[0].mxu0 %v142
    %v238 = vpop.f32.mrb[0].mxu0
    %v239 = vadd.f32 0.0, %v238
    %v240 = vpop.f32.mrb[0].mxu0
    %v241 = vpop.f32.mrb[0].mxu0
    %v242 = vadd.f32 0.0, %v241
    %v243 = vpop.f32.mrb[0].mxu0
    %244 = vdwg.mxu0
    %v261 = vunpack.c.l.b16 %v45
    %v262 = vunpack.c.l.b16 %v46
    %v263 = vunpack.c.l.b16 %v47
    %v264 = vunpack.c.l.b16 %v48
    %v265 = vunpack.c.l.b16 %v49
    %v266 = vunpack.c.l.b16 %v50
    %v267 = vunpack.c.l.b16 %v51
    %v268 = vunpack.c.l.b16 %v52
    %v269 = vunpack.c.l.b16 %v53
    %v270 = vunpack.c.l.b16 %v54
    %v271 = vunpack.c.l.b16 %v55
    %v272 = vunpack.c.l.b16 %v56
    %v273 = vunpack.c.l.b16 %v57
    %v274 = vunpack.c.l.b16 %v58
    %v275 = vunpack.c.l.b16 %v59
    %v276 = vunpack.c.l.b16 %v60
    %v277 = vpack.c.b16 %v262, %v261
    %v278 = vpack.c.b16 %v264, %v263
    %v279 = vpack.c.b16 %v266, %v265
    %v280 = vpack.c.b16 %v268, %v267
    %v281 = vpack.c.b16 %v270, %v269
    %v282 = vpack.c.b16 %v272, %v271
    %v283 = vpack.c.b16 %v274, %v273
    %v284 = vpack.c.b16 %v276, %v275
    %v286 = vsel %vm119, %v277, 0
    %v289 = vsel %vm119, %v278, 0
    %v292 = vsel %vm119, %v279, 0
    %v295 = vsel %vm119, %v280, 0
    %v298 = vsel %vm119, %v281, 0
    %v301 = vsel %vm119, %v282, 0
    %v304 = vsel %vm119, %v283, 0
    %v307 = vsel %vm119, %v284, 0
    %v310 = vsel %vm144, %v77, 0
    %312 = vmatprep.subr.bf16.mxu0 0
    %313 = vmatpush1.bf16.msra.mxu0 %v310
    %314 = vmatprep.subr.bf16.mxu0 0
    %315 = vmatpush1.bf16.msra.mxu0 0
    %316 = vmatprep.subr.bf16.mxu0 0
    %317 = vmatpush1.bf16.msra.mxu0 0
    %318 = vmatprep.subr.bf16.mxu0 0
    %319 = vmatpush1.bf16.msra.mxu0 0
    %320 = vmatprep.subr.bf16.mxu0 0
    %321 = vmatpush1.bf16.msra.mxu0 0
    %322 = vmatprep.subr.bf16.mxu0 0
    %323 = vmatpush1.bf16.msra.mxu0 0
    %324 = vmatprep.subr.bf16.mxu0 0
    %325 = vmatpush1.bf16.msra.mxu0 0
    %326 = vmatprep.subr.bf16.mxu0 0
    %327 = vmatpush1.bf16.msra.mxu0 0
    %328 = vmatprep.subr.bf16.mxu0 0
    %329 = vmatpush1.bf16.msra.mxu0 0
    %330 = vmatprep.subr.bf16.mxu0 0
    %331 = vmatpush1.bf16.msra.mxu0 0
    %332 = vmatprep.subr.bf16.mxu0 0
    %333 = vmatpush1.bf16.msra.mxu0 0
    %334 = vmatprep.subr.bf16.mxu0 0
    %335 = vmatpush1.bf16.msra.mxu0 0
    %336 = vmatprep.subr.bf16.mxu0 0
    %337 = vmatpush1.bf16.msra.mxu0 0
    %338 = vmatprep.subr.bf16.mxu0 0
    %339 = vmatpush1.bf16.msra.mxu0 0
    %340 = vmatprep.subr.bf16.mxu0 0
    %341 = vmatpush1.bf16.msra.mxu0 0
    %342 = vmatprep.subr.bf16.mxu0 0
    %343 = vmatpush1.bf16.msra.mxu0 0
    %344 = vmatprep.mubr.bf16.mxu0 0
    %345 = vmatmul.mubr.bf16.gmra.mrb[0].mxu0 %v286
    %v346 = vpop.f32.mrb[0].mxu0
    %v347 = vadd.f32 %v183, %v346
    %v348 = vpop.f32.mrb[0].mxu0
    %v349 = vpop.f32.mrb[0].mxu0
    %v350 = vadd.f32 %v186, %v349
    %v351 = vpop.f32.mrb[0].mxu0
    %352 = vmatprep.mubr.bf16.mxu0 0
    %353 = vmatmul.mubr.bf16.gmra.mrb[0].mxu0 %v289
    %v354 = vpop.f32.mrb[0].mxu0
    %v355 = vadd.f32 %v191, %v354
    %v356 = vpop.f32.mrb[0].mxu0
    %v357 = vpop.f32.mrb[0].mxu0
    %v358 = vadd.f32 %v194, %v357
    %v359 = vpop.f32.mrb[0].mxu0
    %360 = vmatprep.mubr.bf16.mxu0 0
    %361 = vmatmul.mubr.bf16.gmra.mrb[0].mxu0 %v292
    %v362 = vpop.f32.mrb[0].mxu0
    %v363 = vadd.f32 %v199, %v362
    %v364 = vpop.f32.mrb[0].mxu0
    %v365 = vpop.f32.mrb[0].mxu0
    %v366 = vadd.f32 %v202, %v365
    %v367 = vpop.f32.mrb[0].mxu0
    %368 = vmatprep.mubr.bf16.mxu0 0
    %369 = vmatmul.mubr.bf16.gmra.mrb[0].mxu0 %v295
    %v370 = vpop.f32.mrb[0].mxu0
    %v371 = vadd.f32 %v207, %v370
    %v372 = vpop.f32.mrb[0].mxu0
    %v373 = vpop.f32.mrb[0].mxu0
    %v374 = vadd.f32 %v210, %v373
    %v375 = vpop.f32.mrb[0].mxu0
    %376 = vmatprep.mubr.bf16.mxu0 0
    %377 = vmatmul.mubr.bf16.gmra.mrb[0].mxu0 %v298
    %v378 = vpop.f32.mrb[0].mxu0
    %v379 = vadd.f32 %v215, %v378
    %v380 = vpop.f32.mrb[0].mxu0
    %v381 = vpop.f32.mrb[0].mxu0
    %v382 = vadd.f32 %v218, %v381
    %v383 = vpop.f32.mrb[0].mxu0
    %384 = vmatprep.mubr.bf16.mxu0 0
    %385 = vmatmul.mubr.bf16.gmra.mrb[0].mxu0 %v301
    %v386 = vpop.f32.mrb[0].mxu0
    %v387 = vadd.f32 %v223, %v386
    %v388 = vpop.f32.mrb[0].mxu0
    %v389 = vpop.f32.mrb[0].mxu0
    %v390 = vadd.f32 %v226, %v389
    %v391 = vpop.f32.mrb[0].mxu0
    %392 = vmatprep.mubr.bf16.mxu0 0
    %393 = vmatmul.mubr.bf16.gmra.mrb[0].mxu0 %v304
    %v394 = vpop.f32.mrb[0].mxu0
    %v395 = vadd.f32 %v231, %v394
    %v396 = vpop.f32.mrb[0].mxu0
    %v397 = vpop.f32.mrb[0].mxu0
    %v398 = vadd.f32 %v234, %v397
    %v399 = vpop.f32.mrb[0].mxu0
    %400 = vmatprep.mubr.bf16.mxu0 0
    %401 = vmatmul.mubr.bf16.gmra.mrb[0].mxu0 %v307
    %v402 = vpop.f32.mrb[0].mxu0
    %v403 = vadd.f32 %v239, %v402
    %v404 = vpop.f32.mrb[0].mxu0
    %v405 = vpop.f32.mrb[0].mxu0
    %v406 = vadd.f32 %v242, %v405
    %v407 = vpop.f32.mrb[0].mxu0
    %408 = vdwg.mxu0
    %v409 = vld [vmem:[%s4] sm:$0x1]
    %v411 = vlaneseq
    %v412 = vshrl.u32 %v411, 7
    %v413 = vsub.s32 0, %v412
    %v414 = vrot.slane %v409, %v413
    %v416 = vadd.f32 %v347, %v414
    %v417 = vadd.f32 %v350, %v414
    %v418 = vadd.f32 %v355, %v414
    %v419 = vadd.f32 %v358, %v414
    %v420 = vadd.f32 %v363, %v414
    %v421 = vadd.f32 %v366, %v414
    %v422 = vadd.f32 %v371, %v414
    %v423 = vadd.f32 %v374, %v414
    %v424 = vadd.f32 %v379, %v414
    %v425 = vadd.f32 %v382, %v414
    %v426 = vadd.f32 %v387, %v414
    %v427 = vadd.f32 %v390, %v414
    %v428 = vadd.f32 %v395, %v414
    %v429 = vadd.f32 %v398, %v414
    %v430 = vadd.f32 %v403, %v414
    %v431 = vadd.f32 %v406, %v414
    %v432 = vmax.f32 %v416, 0.0
    %v433 = vmax.f32 %v417, 0.0
    %v434 = vmax.f32 %v418, 0.0
    %v435 = vmax.f32 %v419, 0.0
    %v436 = vmax.f32 %v420, 0.0
    %v437 = vmax.f32 %v421, 0.0
    %v438 = vmax.f32 %v422, 0.0
    %v439 = vmax.f32 %v423, 0.0
    %v440 = vmax.f32 %v424, 0.0
    %v441 = vmax.f32 %v425, 0.0
    %v442 = vmax.f32 %v426, 0.0
    %v443 = vmax.f32 %v427, 0.0
    %v444 = vmax.f32 %v428, 0.0
    %v445 = vmax.f32 %v429, 0.0
    %v446 = vmax.f32 %v430, 0.0
    %v447 = vmax.f32 %v431, 0.0
    %v448 = vld [vmem:[%s5] sm:$0xff]
    %v449 = vld [vmem:[%s5 + $0x8] sm:$0xff]
    %v450 = vld [vmem:[%s5 + $0x10] sm:$0xff]
    %v451 = vld [vmem:[%s5 + $0x18] sm:$0xff]
    %v452 = vld [vmem:[%s6] sm:$0x1]
    %v454 = vlaneseq
    %v455 = vshrl.u32 %v454, 7
    %v456 = vsub.s32 0, %v455
    %v457 = vrot.slane %v452, %v456
    %vm459 = vcmask 261120
    %v461 = vsel %vm459, %v432, 0
    %v464 = vsel %vm459, %v433, 0
    %v467 = vsel %vm459, %v434, 0
    %v470 = vsel %vm459, %v435, 0
    %v473 = vsel %vm459, %v436, 0
    %v476 = vsel %vm459, %v437, 0
    %v479 = vsel %vm459, %v438, 0
    %v482 = vsel %vm459, %v439, 0
    %v485 = vsel %vm459, %v440, 0
    %v488 = vsel %vm459, %v441, 0
    %v491 = vsel %vm459, %v442, 0
    %v494 = vsel %vm459, %v443, 0
    %v497 = vsel %vm459, %v444, 0
    %v500 = vsel %vm459, %v445, 0
    %v503 = vsel %vm459, %v446, 0
    %v506 = vsel %vm459, %v447, 0
    %508 = vmatprep.subr.mxu0 0.0
    %509 = vmatpush1.msra.mxu0 %v448
    %510 = vmatprep.subr.mxu0 0.0
    %511 = vmatpush1.msra.mxu0 %v449
    %512 = vmatprep.subr.mxu0 0.0
    %513 = vmatpush1.msra.mxu0 %v450
    %514 = vmatprep.subr.mxu0 0.0
    %515 = vmatpush1.msra.mxu0 %v451
    %516 = vmatprep.subr.mxu0 0.0
    %517 = vmatpush1.msra.mxu0 0.0
    %518 = vmatprep.subr.mxu0 0.0
    %519 = vmatpush1.msra.mxu0 0.0
    %520 = vmatprep.subr.mxu0 0.0
    %521 = vmatpush1.msra.mxu0 0.0
    %522 = vmatprep.subr.mxu0 0.0
    %523 = vmatpush1.msra.mxu0 0.0
    %524 = vmatprep.subr.mxu0 0.0
    %525 = vmatpush1.msra.mxu0 0.0
    %526 = vmatprep.subr.mxu0 0.0
    %527 = vmatpush1.msra.mxu0 0.0
    %528 = vmatprep.subr.mxu0 0.0
    %529 = vmatpush1.msra.mxu0 0.0
    %530 = vmatprep.subr.mxu0 0.0
    %531 = vmatpush1.msra.mxu0 0.0
    %532 = vmatprep.subr.mxu0 0.0
    %533 = vmatpush1.msra.mxu0 0.0
    %534 = vmatprep.subr.mxu0 0.0
    %535 = vmatpush1.msra.mxu0 0.0
    %536 = vmatprep.subr.mxu0 0.0
    %537 = vmatpush1.msra.mxu0 0.0
    %538 = vmatprep.subr.mxu0 0.0
    %539 = vmatpush1.msra.mxu0 0.0
    %540 = vmatprep.subr.mxu0 0.0
    %541 = vmatpush1.msra.mxu0 0.0
    %542 = vmatprep.subr.mxu0 0.0
    %543 = vmatpush1.msra.mxu0 0.0
    %544 = vmatprep.subr.mxu0 0.0
    %545 = vmatpush1.msra.mxu0 0.0
    %546 = vmatprep.subr.mxu0 0.0
    %547 = vmatpush1.msra.mxu0 0.0
    %548 = vmatprep.subr.mxu0 0.0
    %549 = vmatpush1.msra.mxu0 0.0
    %550 = vmatprep.subr.mxu0 0.0
    %551 = vmatpush1.msra.mxu0 0.0
    %552 = vmatprep.subr.mxu0 0.0
    %553 = vmatpush1.msra.mxu0 0.0
    %554 = vmatprep.subr.mxu0 0.0
    %555 = vmatpush1.msra.mxu0 0.0
    %556 = vmatprep.subr.mxu0 0.0
    %557 = vmatpush1.msra.mxu0 0.0
    %558 = vmatprep.subr.mxu0 0.0
    %559 = vmatpush1.msra.mxu0 0.0
    %560 = vmatprep.subr.mxu0 0.0
    %561 = vmatpush1.msra.mxu0 0.0
    %562 = vmatprep.subr.mxu0 0.0
    %563 = vmatpush1.msra.mxu0 0.0
    %564 = vmatprep.subr.mxu0 0.0
    %565 = vmatpush1.msra.mxu0 0.0
    %566 = vmatprep.subr.mxu0 0.0
    %567 = vmatpush1.msra.mxu0 0.0
    %568 = vmatprep.subr.mxu0 0.0
    %569 = vmatpush1.msra.mxu0 0.0
    %570 = vmatprep.subr.mxu0 0.0
    %571 = vmatpush1.msra.mxu0 0.0
    %572 = vmatprep.mubr.f32.mxu0 0.0
    %573 = vmatmul.mubr.f32.gmra.mrb[0].mxu0 %v461
    %v574 = vpop.f32.mrb[0].mxu0
    %v575 = vadd.f32 %v457, %v574
    %v576 = vpop.f32.mrb[0].mxu0
    %577 = vmatprep.mubr.f32.mxu0 0.0
    %578 = vmatmul.mubr.f32.gmra.mrb[0].mxu0 %v464
    %v579 = vpop.f32.mrb[0].mxu0
    %v580 = vadd.f32 %v457, %v579
    %v581 = vpop.f32.mrb[0].mxu0
    %582 = vmatprep.mubr.f32.mxu0 0.0
    %583 = vmatmul.mubr.f32.gmra.mrb[0].mxu0 %v467
    %v584 = vpop.f32.mrb[0].mxu0
    %v585 = vadd.f32 %v457, %v584
    %v586 = vpop.f32.mrb[0].mxu0
    %587 = vmatprep.mubr.f32.mxu0 0.0
    %588 = vmatmul.mubr.f32.gmra.mrb[0].mxu0 %v470
    %v589 = vpop.f32.mrb[0].mxu0
    %v590 = vadd.f32 %v457, %v589
    %v591 = vpop.f32.mrb[0].mxu0
    %592 = vmatprep.mubr.f32.mxu0 0.0
    %593 = vmatmul.mubr.f32.gmra.mrb[0].mxu0 %v473
    %v594 = vpop.f32.mrb[0].mxu0
    %v595 = vadd.f32 %v457, %v594
    %v596 = vpop.f32.mrb[0].mxu0
    %597 = vmatprep.mubr.f32.mxu0 0.0
    %598 = vmatmul.mubr.f32.gmra.mrb[0].mxu0 %v476
    %v599 = vpop.f32.mrb[0].mxu0
    %v600 = vadd.f32 %v457, %v599
    %v601 = vpop.f32.mrb[0].mxu0
    %602 = vmatprep.mubr.f32.mxu0 0.0
    %603 = vmatmul.mubr.f32.gmra.mrb[0].mxu0 %v479
    %v604 = vpop.f32.mrb[0].mxu0
    %v605 = vadd.f32 %v457, %v604
    %v606 = vpop.f32.mrb[0].mxu0
    %607 = vmatprep.mubr.f32.mxu0 0.0
    %608 = vmatmul.mubr.f32.gmra.mrb[0].mxu0 %v482
    %v609 = vpop.f32.mrb[0].mxu0
    %v610 = vadd.f32 %v457, %v609
    %v611 = vpop.f32.mrb[0].mxu0
    %612 = vmatprep.mubr.f32.mxu0 0.0
    %613 = vmatmul.mubr.f32.gmra.mrb[0].mxu0 %v485
    %v614 = vpop.f32.mrb[0].mxu0
    %v615 = vadd.f32 %v457, %v614
    %v616 = vpop.f32.mrb[0].mxu0
    %617 = vmatprep.mubr.f32.mxu0 0.0
    %618 = vmatmul.mubr.f32.gmra.mrb[0].mxu0 %v488
    %v619 = vpop.f32.mrb[0].mxu0
    %v620 = vadd.f32 %v457, %v619
    %v621 = vpop.f32.mrb[0].mxu0
    %622 = vmatprep.mubr.f32.mxu0 0.0
    %623 = vmatmul.mubr.f32.gmra.mrb[0].mxu0 %v491
    %v624 = vpop.f32.mrb[0].mxu0
    %v625 = vadd.f32 %v457, %v624
    %v626 = vpop.f32.mrb[0].mxu0
    %627 = vmatprep.mubr.f32.mxu0 0.0
    %628 = vmatmul.mubr.f32.gmra.mrb[0].mxu0 %v494
    %v629 = vpop.f32.mrb[0].mxu0
    %v630 = vadd.f32 %v457, %v629
    %v631 = vpop.f32.mrb[0].mxu0
    %632 = vmatprep.mubr.f32.mxu0 0.0
    %633 = vmatmul.mubr.f32.gmra.mrb[0].mxu0 %v497
    %v634 = vpop.f32.mrb[0].mxu0
    %v635 = vadd.f32 %v457, %v634
    %v636 = vpop.f32.mrb[0].mxu0
    %637 = vmatprep.mubr.f32.mxu0 0.0
    %638 = vmatmul.mubr.f32.gmra.mrb[0].mxu0 %v500
    %v639 = vpop.f32.mrb[0].mxu0
    %v640 = vadd.f32 %v457, %v639
    %v641 = vpop.f32.mrb[0].mxu0
    %642 = vmatprep.mubr.f32.mxu0 0.0
    %643 = vmatmul.mubr.f32.gmra.mrb[0].mxu0 %v503
    %v644 = vpop.f32.mrb[0].mxu0
    %v645 = vadd.f32 %v457, %v644
    %v646 = vpop.f32.mrb[0].mxu0
    %647 = vmatprep.mubr.f32.mxu0 0.0
    %648 = vmatmul.mubr.f32.gmra.mrb[0].mxu0 %v506
    %v649 = vpop.f32.mrb[0].mxu0
    %v650 = vadd.f32 %v457, %v649
    %v651 = vpop.f32.mrb[0].mxu0
    %652 = vdwg.mxu0
    %v653 = vmax.f32 %v575, 0.0
    %v654 = vmax.f32 %v580, 0.0
    %v655 = vmax.f32 %v585, 0.0
    %v656 = vmax.f32 %v590, 0.0
    %v657 = vmax.f32 %v595, 0.0
    %v658 = vmax.f32 %v600, 0.0
    %v659 = vmax.f32 %v605, 0.0
    %v660 = vmax.f32 %v610, 0.0
    %v661 = vmax.f32 %v615, 0.0
    %v662 = vmax.f32 %v620, 0.0
    %v663 = vmax.f32 %v625, 0.0
    %v664 = vmax.f32 %v630, 0.0
    %v665 = vmax.f32 %v635, 0.0
    %v666 = vmax.f32 %v640, 0.0
    %v667 = vmax.f32 %v645, 0.0
    %v668 = vmax.f32 %v650, 0.0
    %v669 = vld [vmem:[%s7] sm:$0xff]
    %v670 = vld [vmem:[%s7 + $0x8] sm:$0xff]
    %v671 = vld [vmem:[%s8] sm:$0x1]
    %v673 = vlaneseq
    %v674 = vshrl.u32 %v673, 7
    %v675 = vsub.s32 0, %v674
    %v676 = vrot.slane %v671, %v675
    %vm678 = vcmask 130048
    %v680 = vsel %vm678, %v653, 0
    %v683 = vsel %vm678, %v654, 0
    %v686 = vsel %vm678, %v655, 0
    %v689 = vsel %vm678, %v656, 0
    %v692 = vsel %vm678, %v657, 0
    %v695 = vsel %vm678, %v658, 0
    %v698 = vsel %vm678, %v659, 0
    %v701 = vsel %vm678, %v660, 0
    %v704 = vsel %vm678, %v661, 0
    %v707 = vsel %vm678, %v662, 0
    %v710 = vsel %vm678, %v663, 0
    %v713 = vsel %vm678, %v664, 0
    %v716 = vsel %vm678, %v665, 0
    %v719 = vsel %vm678, %v666, 0
    %v722 = vsel %vm678, %v667, 0
    %v725 = vsel %vm678, %v668, 0
    %727 = vmatprep.subr.mxu0 0.0
    %728 = vmatpush1.msra.mxu0 %v669
    %729 = vmatprep.subr.mxu0 0.0
    %730 = vmatpush1.msra.mxu0 %v670
    %731 = vmatprep.subr.mxu0 0.0
    %732 = vmatpush1.msra.mxu0 0.0
    %733 = vmatprep.subr.mxu0 0.0
    %734 = vmatpush1.msra.mxu0 0.0
    %735 = vmatprep.subr.mxu0 0.0
    %736 = vmatpush1.msra.mxu0 0.0
    %737 = vmatprep.subr.mxu0 0.0
    %738 = vmatpush1.msra.mxu0 0.0
    %739 = vmatprep.subr.mxu0 0.0
    %740 = vmatpush1.msra.mxu0 0.0
    %741 = vmatprep.subr.mxu0 0.0
    %742 = vmatpush1.msra.mxu0 0.0
    %743 = vmatprep.subr.mxu0 0.0
    %744 = vmatpush1.msra.mxu0 0.0
    %745 = vmatprep.subr.mxu0 0.0
    %746 = vmatpush1.msra.mxu0 0.0
    %747 = vmatprep.subr.mxu0 0.0
    %748 = vmatpush1.msra.mxu0 0.0
    %749 = vmatprep.subr.mxu0 0.0
    %750 = vmatpush1.msra.mxu0 0.0
    %751 = vmatprep.subr.mxu0 0.0
    %752 = vmatpush1.msra.mxu0 0.0
    %753 = vmatprep.subr.mxu0 0.0
    %754 = vmatpush1.msra.mxu0 0.0
    %755 = vmatprep.subr.mxu0 0.0
    %756 = vmatpush1.msra.mxu0 0.0
    %757 = vmatprep.subr.mxu0 0.0
    %758 = vmatpush1.msra.mxu0 0.0
    %759 = vmatprep.subr.mxu0 0.0
    %760 = vmatpush1.msra.mxu0 0.0
    %761 = vmatprep.subr.mxu0 0.0
    %762 = vmatpush1.msra.mxu0 0.0
    %763 = vmatprep.subr.mxu0 0.0
    %764 = vmatpush1.msra.mxu0 0.0
    %765 = vmatprep.subr.mxu0 0.0
    %766 = vmatpush1.msra.mxu0 0.0
    %767 = vmatprep.subr.mxu0 0.0
    %768 = vmatpush1.msra.mxu0 0.0
    %769 = vmatprep.subr.mxu0 0.0
    %770 = vmatpush1.msra.mxu0 0.0
    %771 = vmatprep.subr.mxu0 0.0
    %772 = vmatpush1.msra.mxu0 0.0
    %773 = vmatprep.subr.mxu0 0.0
    %774 = vmatpush1.msra.mxu0 0.0
    %775 = vmatprep.subr.mxu0 0.0
    %776 = vmatpush1.msra.mxu0 0.0
    %777 = vmatprep.subr.mxu0 0.0
    %778 = vmatpush1.msra.mxu0 0.0
    %779 = vmatprep.subr.mxu0 0.0
    %780 = vmatpush1.msra.mxu0 0.0
    %781 = vmatprep.subr.mxu0 0.0
    %782 = vmatpush1.msra.mxu0 0.0
    %783 = vmatprep.subr.mxu0 0.0
    %784 = vmatpush1.msra.mxu0 0.0
    %785 = vmatprep.subr.mxu0 0.0
    %786 = vmatpush1.msra.mxu0 0.0
    %787 = vmatprep.subr.mxu0 0.0
    %788 = vmatpush1.msra.mxu0 0.0
    %789 = vmatprep.subr.mxu0 0.0
    %790 = vmatpush1.msra.mxu0 0.0
    %791 = vmatprep.mubr.f32.mxu0 0.0
    %792 = vmatmul.mubr.f32.gmra.mrb[0].mxu0 %v680
    %v793 = vpop.f32.mrb[0].mxu0
    %v794 = vadd.f32 %v676, %v793
    %v795 = vpop.f32.mrb[0].mxu0
    %796 = vmatprep.mubr.f32.mxu0 0.0
    %797 = vmatmul.mubr.f32.gmra.mrb[0].mxu0 %v683
    %v798 = vpop.f32.mrb[0].mxu0
    %v799 = vadd.f32 %v676, %v798
    %v800 = vpop.f32.mrb[0].mxu0
    %801 = vmatprep.mubr.f32.mxu0 0.0
    %802 = vmatmul.mubr.f32.gmra.mrb[0].mxu0 %v686
    %v803 = vpop.f32.mrb[0].mxu0
    %v804 = vadd.f32 %v676, %v803
    %v805 = vpop.f32.mrb[0].mxu0
    %806 = vmatprep.mubr.f32.mxu0 0.0
    %807 = vmatmul.mubr.f32.gmra.mrb[0].mxu0 %v689
    %v808 = vpop.f32.mrb[0].mxu0
    %v809 = vadd.f32 %v676, %v808
    %v810 = vpop.f32.mrb[0].mxu0
    %811 = vmatprep.mubr.f32.mxu0 0.0
    %812 = vmatmul.mubr.f32.gmra.mrb[0].mxu0 %v692
    %v813 = vpop.f32.mrb[0].mxu0
    %v814 = vadd.f32 %v676, %v813
    %v815 = vpop.f32.mrb[0].mxu0
    %816 = vmatprep.mubr.f32.mxu0 0.0
    %817 = vmatmul.mubr.f32.gmra.mrb[0].mxu0 %v695
    %v818 = vpop.f32.mrb[0].mxu0
    %v819 = vadd.f32 %v676, %v818
    %v820 = vpop.f32.mrb[0].mxu0
    %821 = vmatprep.mubr.f32.mxu0 0.0
    %822 = vmatmul.mubr.f32.gmra.mrb[0].mxu0 %v698
    %v823 = vpop.f32.mrb[0].mxu0
    %v824 = vadd.f32 %v676, %v823
    %v825 = vpop.f32.mrb[0].mxu0
    %826 = vmatprep.mubr.f32.mxu0 0.0
    %827 = vmatmul.mubr.f32.gmra.mrb[0].mxu0 %v701
    %v828 = vpop.f32.mrb[0].mxu0
    %v829 = vadd.f32 %v676, %v828
    %v830 = vpop.f32.mrb[0].mxu0
    %831 = vmatprep.mubr.f32.mxu0 0.0
    %832 = vmatmul.mubr.f32.gmra.mrb[0].mxu0 %v704
    %v833 = vpop.f32.mrb[0].mxu0
    %v834 = vadd.f32 %v676, %v833
    %v835 = vpop.f32.mrb[0].mxu0
    %836 = vmatprep.mubr.f32.mxu0 0.0
    %837 = vmatmul.mubr.f32.gmra.mrb[0].mxu0 %v707
    %v838 = vpop.f32.mrb[0].mxu0
    %v839 = vadd.f32 %v676, %v838
    %v840 = vpop.f32.mrb[0].mxu0
    %841 = vmatprep.mubr.f32.mxu0 0.0
    %842 = vmatmul.mubr.f32.gmra.mrb[0].mxu0 %v710
    %v843 = vpop.f32.mrb[0].mxu0
    %v844 = vadd.f32 %v676, %v843
    %v845 = vpop.f32.mrb[0].mxu0
    %846 = vmatprep.mubr.f32.mxu0 0.0
    %847 = vmatmul.mubr.f32.gmra.mrb[0].mxu0 %v713
    %v848 = vpop.f32.mrb[0].mxu0
    %v849 = vadd.f32 %v676, %v848
    %v850 = vpop.f32.mrb[0].mxu0
    %851 = vmatprep.mubr.f32.mxu0 0.0
    %852 = vmatmul.mubr.f32.gmra.mrb[0].mxu0 %v716
    %v853 = vpop.f32.mrb[0].mxu0
    %v854 = vadd.f32 %v676, %v853
    %v855 = vpop.f32.mrb[0].mxu0
    %856 = vmatprep.mubr.f32.mxu0 0.0
    %857 = vmatmul.mubr.f32.gmra.mrb[0].mxu0 %v719
    %v858 = vpop.f32.mrb[0].mxu0
    %v859 = vadd.f32 %v676, %v858
    %v860 = vpop.f32.mrb[0].mxu0
    %861 = vmatprep.mubr.f32.mxu0 0.0
    %862 = vmatmul.mubr.f32.gmra.mrb[0].mxu0 %v722
    %v863 = vpop.f32.mrb[0].mxu0
    %v864 = vadd.f32 %v676, %v863
    %v865 = vpop.f32.mrb[0].mxu0
    %866 = vmatprep.mubr.f32.mxu0 0.0
    %867 = vmatmul.mubr.f32.gmra.mrb[0].mxu0 %v725
    %v868 = vpop.f32.mrb[0].mxu0
    %v869 = vadd.f32 %v676, %v868
    %v870 = vpop.f32.mrb[0].mxu0
    %871 = vdwg.mxu0
    %v872 = vmax.f32 %v794, 0.0
    %v873 = vmax.f32 %v799, 0.0
    %v874 = vmax.f32 %v804, 0.0
    %v875 = vmax.f32 %v809, 0.0
    %v876 = vmax.f32 %v814, 0.0
    %v877 = vmax.f32 %v819, 0.0
    %v878 = vmax.f32 %v824, 0.0
    %v879 = vmax.f32 %v829, 0.0
    %v880 = vmax.f32 %v834, 0.0
    %v881 = vmax.f32 %v839, 0.0
    %v882 = vmax.f32 %v844, 0.0
    %v883 = vmax.f32 %v849, 0.0
    %v884 = vmax.f32 %v854, 0.0
    %v885 = vmax.f32 %v859, 0.0
    %v886 = vmax.f32 %v864, 0.0
    %v887 = vmax.f32 %v869, 0.0
    %v888 = vunpack.c.l.bf16 %v45
    %v889 = vunpack.c.l.bf16 %v46
    %v890 = vunpack.c.l.bf16 %v47
    %v891 = vunpack.c.l.bf16 %v48
    %v892 = vunpack.c.l.bf16 %v49
    %v893 = vunpack.c.l.bf16 %v50
    %v894 = vunpack.c.l.bf16 %v51
    %v895 = vunpack.c.l.bf16 %v52
    %v896 = vunpack.c.l.bf16 %v53
    %v897 = vunpack.c.l.bf16 %v54
    %v898 = vunpack.c.l.bf16 %v55
    %v899 = vunpack.c.l.bf16 %v56
    %v900 = vunpack.c.l.bf16 %v57
    %v901 = vunpack.c.l.bf16 %v58
    %v902 = vunpack.c.l.bf16 %v59
    %v903 = vunpack.c.l.bf16 %v60
    %v904 = vunpack.c.l.bf16 %v61
    %v905 = vunpack.c.l.bf16 %v62
    %v906 = vunpack.c.l.bf16 %v63
    %v907 = vunpack.c.l.bf16 %v64
    %v908 = vunpack.c.l.bf16 %v65
    %v909 = vunpack.c.l.bf16 %v66
    %v910 = vunpack.c.l.bf16 %v67
    %v911 = vunpack.c.l.bf16 %v68
    %v912 = vunpack.c.l.bf16 %v69
    %v913 = vunpack.c.l.bf16 %v70
    %v914 = vunpack.c.l.bf16 %v71
    %v915 = vunpack.c.l.bf16 %v72
    %v916 = vunpack.c.l.bf16 %v73
    %v917 = vunpack.c.l.bf16 %v74
    %v918 = vunpack.c.l.bf16 %v75
    %v919 = vunpack.c.l.bf16 %v76
    %v920 = vmul.f32 %v888, %v904
    %v921 = vmul.f32 %v889, %v905
    %v922 = vmul.f32 %v890, %v906
    %v923 = vmul.f32 %v891, %v907
    %v924 = vmul.f32 %v892, %v908
    %v925 = vmul.f32 %v893, %v909
    %v926 = vmul.f32 %v894, %v910
    %v927 = vmul.f32 %v895, %v911
    %v928 = vmul.f32 %v896, %v912
    %v929 = vmul.f32 %v897, %v913
    %v930 = vmul.f32 %v898, %v914
    %v931 = vmul.f32 %v899, %v915
    %v932 = vmul.f32 %v900, %v916
    %v933 = vmul.f32 %v901, %v917
    %v934 = vmul.f32 %v902, %v918
    %v935 = vmul.f32 %v903, %v919
    %v936 = vld [vmem:[%s9] sm:$0x1]
    %v937 = vld [vmem:[%s10] sm:$0x1]
    %954 = vrot.lane.b32.xlu0 %v920, 120
    %v955 = vpop.permute.xlu0 %954
    %956 = vrot.lane.b32.xlu0 %v921, 120
    %v957 = vpop.permute.xlu0 %956
    %958 = vrot.lane.b32.xlu0 %v922, 120
    %v959 = vpop.permute.xlu0 %958
    %960 = vrot.lane.b32.xlu0 %v923, 120
    %v961 = vpop.permute.xlu0 %960
    %962 = vrot.lane.b32.xlu0 %v924, 120
    %v963 = vpop.permute.xlu0 %962
    %964 = vrot.lane.b32.xlu0 %v925, 120
    %v965 = vpop.permute.xlu0 %964
    %966 = vrot.lane.b32.xlu0 %v926, 120
    %v967 = vpop.permute.xlu0 %966
    %968 = vrot.lane.b32.xlu0 %v927, 120
    %v969 = vpop.permute.xlu0 %968
    %970 = vrot.lane.b32.xlu0 %v928, 120
    %v971 = vpop.permute.xlu0 %970
    %972 = vrot.lane.b32.xlu0 %v929, 120
    %v973 = vpop.permute.xlu0 %972
    %974 = vrot.lane.b32.xlu0 %v930, 120
    %v975 = vpop.permute.xlu0 %974
    %976 = vrot.lane.b32.xlu0 %v931, 120
    %v977 = vpop.permute.xlu0 %976
    %978 = vrot.lane.b32.xlu0 %v932, 120
    %v979 = vpop.permute.xlu0 %978
    %980 = vrot.lane.b32.xlu0 %v933, 120
    %v981 = vpop.permute.xlu0 %980
    %982 = vrot.lane.b32.xlu0 %v934, 120
    %v983 = vpop.permute.xlu0 %982
    %984 = vrot.lane.b32.xlu0 %v935, 120
    %v985 = vpop.permute.xlu0 %984
    %v987 = vsel %vm119, %v937, 0
    %v989 = vsel %vm119, %v955, 0
    %v991 = vsel %vm119, %v957, 0
    %v993 = vsel %vm119, %v959, 0
    %v995 = vsel %vm119, %v961, 0
    %v997 = vsel %vm119, %v963, 0
    %v999 = vsel %vm119, %v965, 0
    %v1001 = vsel %vm119, %v967, 0
    %v1003 = vsel %vm119, %v969, 0
    %v1005 = vsel %vm119, %v971, 0
    %v1007 = vsel %vm119, %v973, 0
    %v1009 = vsel %vm119, %v975, 0
    %v1011 = vsel %vm119, %v977, 0
    %v1013 = vsel %vm119, %v979, 0
    %v1015 = vsel %vm119, %v981, 0
    %v1017 = vsel %vm119, %v983, 0
    %v1019 = vsel %vm119, %v985, 0
    %1021 = vmatprep.subr.mxu0 0.0
    %1022 = vmatpush1.xpose.msra.mxu0 %v989
    %1023 = vmatprep.subr.mxu0 0.0
    %1024 = vmatpush1.xpose.msra.mxu0 %v991
    %1025 = vmatprep.subr.mxu0 0.0
    %1026 = vmatpush1.xpose.msra.mxu0 %v993
    %1027 = vmatprep.subr.mxu0 0.0
    %1028 = vmatpush1.xpose.msra.mxu0 %v995
    %1029 = vmatprep.subr.mxu0 0.0
    %1030 = vmatpush1.xpose.msra.mxu0 %v997
    %1031 = vmatprep.subr.mxu0 0.0
    %1032 = vmatpush1.xpose.msra.mxu0 %v999
    %1033 = vmatprep.subr.mxu0 0.0
    %1034 = vmatpush1.xpose.msra.mxu0 %v1001
    %1035 = vmatprep.subr.mxu0 0.0
    %1036 = vmatpush1.xpose.msra.mxu0 %v1003
    %1037 = vmatprep.subr.mxu0 0.0
    %1038 = vmatpush1.xpose.msra.mxu0 %v1005
    %1039 = vmatprep.subr.mxu0 0.0
    %1040 = vmatpush1.xpose.msra.mxu0 %v1007
    %1041 = vmatprep.subr.mxu0 0.0
    %1042 = vmatpush1.xpose.msra.mxu0 %v1009
    %1043 = vmatprep.subr.mxu0 0.0
    %1044 = vmatpush1.xpose.msra.mxu0 %v1011
    %1045 = vmatprep.subr.mxu0 0.0
    %1046 = vmatpush1.xpose.msra.mxu0 %v1013
    %1047 = vmatprep.subr.mxu0 0.0
    %1048 = vmatpush1.xpose.msra.mxu0 %v1015
    %1049 = vmatprep.subr.mxu0 0.0
    %1050 = vmatpush1.xpose.msra.mxu0 %v1017
    %1051 = vmatprep.subr.mxu0 0.0
    %1052 = vmatpush1.xpose.msra.mxu0 %v1019
    %1053 = vmatprep.subr.mxu0 0.0
    %1054 = vmatpush1.xpose.msra.mxu0 0.0
    %1055 = vmatprep.subr.mxu0 0.0
    %1056 = vmatpush1.xpose.msra.mxu0 0.0
    %1057 = vmatprep.subr.mxu0 0.0
    %1058 = vmatpush1.xpose.msra.mxu0 0.0
    %1059 = vmatprep.subr.mxu0 0.0
    %1060 = vmatpush1.xpose.msra.mxu0 0.0
    %1061 = vmatprep.subr.mxu0 0.0
    %1062 = vmatpush1.xpose.msra.mxu0 0.0
    %1063 = vmatprep.subr.mxu0 0.0
    %1064 = vmatpush1.xpose.msra.mxu0 0.0
    %1065 = vmatprep.subr.mxu0 0.0
    %1066 = vmatpush1.xpose.msra.mxu0 0.0
    %1067 = vmatprep.subr.mxu0 0.0
    %1068 = vmatpush1.xpose.msra.mxu0 0.0
    %1069 = vmatprep.subr.mxu0 0.0
    %1070 = vmatpush1.xpose.msra.mxu0 0.0
    %1071 = vmatprep.subr.mxu0 0.0
    %1072 = vmatpush1.xpose.msra.mxu0 0.0
    %1073 = vmatprep.subr.mxu0 0.0
    %1074 = vmatpush1.xpose.msra.mxu0 0.0
    %1075 = vmatprep.subr.mxu0 0.0
    %1076 = vmatpush1.xpose.msra.mxu0 0.0
    %1077 = vmatprep.subr.mxu0 0.0
    %1078 = vmatpush1.xpose.msra.mxu0 0.0
    %1079 = vmatprep.subr.mxu0 0.0
    %1080 = vmatpush1.xpose.msra.mxu0 0.0
    %1081 = vmatprep.subr.mxu0 0.0
    %1082 = vmatpush1.xpose.msra.mxu0 0.0
    %1083 = vmatprep.subr.mxu0 0.0
    %1084 = vmatpush1.xpose.msra.mxu0 0.0
    %1085 = vmatprep.mubr.f32.mxu0 0.0
    %1086 = vmatmul.mubr.f32.gmra.mrb[0].mxu0 %v987
    %v1087 = vpop.f32.mrb[0].mxu0
    %v1088 = vadd.f32 0.0, %v1087
    %v1089 = vpop.f32.mrb[0].mxu0
    %1090 = vdwg.mxu0
    %v1092 = vsel %vm119, %v936, 0
    %v1095 = vsel %vm119, %v872, 0
    %v1098 = vsel %vm119, %v873, 0
    %v1101 = vsel %vm119, %v874, 0
    %v1104 = vsel %vm119, %v875, 0
    %v1107 = vsel %vm119, %v876, 0
    %v1110 = vsel %vm119, %v877, 0
    %v1113 = vsel %vm119, %v878, 0
    %v1116 = vsel %vm119, %v879, 0
    %v1119 = vsel %vm119, %v880, 0
    %v1122 = vsel %vm119, %v881, 0
    %v1125 = vsel %vm119, %v882, 0
    %v1128 = vsel %vm119, %v883, 0
    %v1131 = vsel %vm119, %v884, 0
    %v1134 = vsel %vm119, %v885, 0
    %v1137 = vsel %vm119, %v886, 0
    %v1140 = vsel %vm119, %v887, 0
    %1142 = vmatprep.subr.mxu0 0.0
    %1143 = vmatpush1.xpose.msra.mxu0 %v1095
    %1144 = vmatprep.subr.mxu0 0.0
    %1145 = vmatpush1.xpose.msra.mxu0 %v1098
    %1146 = vmatprep.subr.mxu0 0.0
    %1147 = vmatpush1.xpose.msra.mxu0 %v1101
    %1148 = vmatprep.subr.mxu0 0.0
    %1149 = vmatpush1.xpose.msra.mxu0 %v1104
    %1150 = vmatprep.subr.mxu0 0.0
    %1151 = vmatpush1.xpose.msra.mxu0 %v1107
    %1152 = vmatprep.subr.mxu0 0.0
    %1153 = vmatpush1.xpose.msra.mxu0 %v1110
    %1154 = vmatprep.subr.mxu0 0.0
    %1155 = vmatpush1.xpose.msra.mxu0 %v1113
    %1156 = vmatprep.subr.mxu0 0.0
    %1157 = vmatpush1.xpose.msra.mxu0 %v1116
    %1158 = vmatprep.subr.mxu0 0.0
    %1159 = vmatpush1.xpose.msra.mxu0 %v1119
    %1160 = vmatprep.subr.mxu0 0.0
    %1161 = vmatpush1.xpose.msra.mxu0 %v1122
    %1162 = vmatprep.subr.mxu0 0.0
    %1163 = vmatpush1.xpose.msra.mxu0 %v1125
    %1164 = vmatprep.subr.mxu0 0.0
    %1165 = vmatpush1.xpose.msra.mxu0 %v1128
    %1166 = vmatprep.subr.mxu0 0.0
    %1167 = vmatpush1.xpose.msra.mxu0 %v1131
    %1168 = vmatprep.subr.mxu0 0.0
    %1169 = vmatpush1.xpose.msra.mxu0 %v1134
    %1170 = vmatprep.subr.mxu0 0.0
    %1171 = vmatpush1.xpose.msra.mxu0 %v1137
    %1172 = vmatprep.subr.mxu0 0.0
    %1173 = vmatpush1.xpose.msra.mxu0 %v1140
    %1174 = vmatprep.subr.mxu0 0.0
    %1175 = vmatpush1.xpose.msra.mxu0 0.0
    %1176 = vmatprep.subr.mxu0 0.0
    %1177 = vmatpush1.xpose.msra.mxu0 0.0
    %1178 = vmatprep.subr.mxu0 0.0
    %1179 = vmatpush1.xpose.msra.mxu0 0.0
    %1180 = vmatprep.subr.mxu0 0.0
    %1181 = vmatpush1.xpose.msra.mxu0 0.0
    %1182 = vmatprep.subr.mxu0 0.0
    %1183 = vmatpush1.xpose.msra.mxu0 0.0
    %1184 = vmatprep.subr.mxu0 0.0
    %1185 = vmatpush1.xpose.msra.mxu0 0.0
    %1186 = vmatprep.subr.mxu0 0.0
    %1187 = vmatpush1.xpose.msra.mxu0 0.0
    %1188 = vmatprep.subr.mxu0 0.0
    %1189 = vmatpush1.xpose.msra.mxu0 0.0
    %1190 = vmatprep.subr.mxu0 0.0
    %1191 = vmatpush1.xpose.msra.mxu0 0.0
    %1192 = vmatprep.subr.mxu0 0.0
    %1193 = vmatpush1.xpose.msra.mxu0 0.0
    %1194 = vmatprep.subr.mxu0 0.0
    %1195 = vmatpush1.xpose.msra.mxu0 0.0
    %1196 = vmatprep.subr.mxu0 0.0
    %1197 = vmatpush1.xpose.msra.mxu0 0.0
    %1198 = vmatprep.subr.mxu0 0.0
    %1199 = vmatpush1.xpose.msra.mxu0 0.0
    %1200 = vmatprep.subr.mxu0 0.0
    %1201 = vmatpush1.xpose.msra.mxu0 0.0
    %1202 = vmatprep.subr.mxu0 0.0
    %1203 = vmatpush1.xpose.msra.mxu0 0.0
    %1204 = vmatprep.subr.mxu0 0.0
    %1205 = vmatpush1.xpose.msra.mxu0 0.0
    %1206 = vmatprep.mubr.f32.mxu0 0.0
    %1207 = vmatmul.mubr.f32.gmra.mrb[0].mxu0 %v1092
    %v1208 = vpop.f32.mrb[0].mxu0
    %v1209 = vadd.f32 %v1088, %v1208
    %v1210 = vpop.f32.mrb[0].mxu0
    %1211 = vdwg.mxu0
    %v1212 = vld [vmem:[#allocation2] sm:$0x1]
    %1214 = vset.pattern.permute.xlu0 0
    %1215 = vperm.xlu0 %1214, %v1212
    %v1216 = vpop.permute.xlu0 %1215
    %v1218 = vlaneseq
    %v1219 = vshrl.u32 %v1218, 7
    %v1220 = vsub.s32 0, %v1219
    %v1221 = vrot.slane %v1216, %v1220
    %v1222 = vadd.f32 %v1209, %v1221
    %v1223 = vxor.u32 %v1222, 2147483648
    %v1224 = vmul.f32 %v1223, 1.442695
    %v1225 = vpow.pop %v1224
    %v1226 = vadd.f32 %v1225, 1.0
    %v1227 = vrcp.pop %v1226
    %v1228 = vmul.f32 1.0, %v1227
    %1229 = vst [vmem:[#allocation3] sm:$0x1] %v1228
    // Predicated region
    $region50: #{tpu_custom_call.1} parent=1 // pred_check
      _
    $region51: #{tpu_custom_call.1} parent=1 // pred_check_branch
      %1231 = sbr.rel (0) target = $region53
    $region52: #{tpu_custom_call.1} parent=1 // pred_region
      %s1233 = ssub.s32 16, 16
      %1234 = vsyncadd [#allocation4], %s1233
      %s1236 = sshll.u32 [#allocation3], 4
      %s1237 = int_to_ptr.vmem [resolvable:$true] %s1236
      %1239 = dma.vmem_to_hbm [thread:$0]  %s1237, 16, %s12, [#allocation4]
    $region53: #{tpu_custom_call.1} parent=1 // pred_fallthru
      _
    // Predicated region
    $region54: #{tpu_custom_call.1} parent=1 // pred_check
      _
    $region55: #{tpu_custom_call.1} parent=1 // pred_check_branch
      %1241 = sbr.rel (0) target = $region57
    $region56: #{tpu_custom_call.1} parent=1 // pred_region
      %1242 = dma.done [#allocation4], 16
    $region57: #{tpu_custom_call.1} parent=1 // pred_fallthru
      _
    %1243 = vsyncpa [#allocation4], 1

</llo_original>
